<compile_context>
chip_gen: v5e
topology: v5e:2x2
jax: 0.10.0
libtpu: 0.0.40
codegen_flags: <defaults>
</compile_context>

<pallas_src>
import functools

import jax
import jax.numpy as jnp
from jax.experimental import pallas as pl
from jax.experimental.pallas import tpu as pltpu


def _fused_linear_kernel(x_ref, w_ref, b_ref, o_ref, acc_ref):
    # x_ref: (tm, tk), w_ref: (tk, tn), b_ref: (1, tn), o_ref: (tm, tn)
    # acc_ref: (tm, tn) f32 scratch that persists across the K grid axis.
    k = pl.program_id(2)

    @pl.when(k == 0)
    def _():
        acc_ref[...] = jnp.zeros_like(acc_ref)

    acc_ref[...] += jnp.dot(
        x_ref[...], w_ref[...], preferred_element_type=jnp.float32
    )

    @pl.when(k == pl.num_programs(2) - 1)
    def _():
        o_ref[...] = (acc_ref[...] + b_ref[...].astype(jnp.float32)).astype(
            o_ref.dtype
        )


def _round_up(x, m):
    return ((x + m - 1) // m) * m


@functools.partial(jax.jit, static_argnames=("tm", "tn", "tk"))
def linear_layer(linput, rinput, lmat, rmat, bias, *, tm=None, tn=None, tk=None):
    M, K = linput.shape
    Kw, N = lmat.shape
    assert rinput.shape == (M, K)
    assert lmat.shape == (K, N) and rmat.shape == (K, N)
    assert bias.shape == (1, N)

    # Fuse the two contractions: x = [linput | rinput] (M, 2K),
    #                            w = [lmat ; rmat]     (2K, N).
    x = jnp.concatenate([linput, rinput], axis=1)
    w = jnp.concatenate([lmat, rmat], axis=0)
    Kc = 2 * K

    # --- tile selection (shapes are static under jit) -----------------------
    # Big tiles for MXU utilization / HBM arithmetic intensity; clamp to the
    # (padded) problem size.  f32 needs sublane multiples of 8, lanes of 128.
    if tm is None:
        tm = 256 if M >= 256 else _round_up(M, 8)
    if tn is None:
        tn = 256 if N >= 512 else _round_up(min(N, 256), 128)
    if tk is None:
        tk = 512 if Kc >= 512 else _round_up(Kc, 128)

    Mp = _round_up(M, tm)
    Np = _round_up(N, tn)
    Kp = _round_up(Kc, tk)

    # --- zero-pad to tile multiples (exact for matmul + bias) ---------------
    if Mp != M or Kp != Kc:
        x = jnp.pad(x, ((0, Mp - M), (0, Kp - Kc)))
    if Kp != Kc or Np != N:
        w = jnp.pad(w, ((0, Kp - Kc), (0, Np - N)))
    b = jnp.pad(bias, ((0, 0), (0, Np - N))) if Np != N else bias

    grid = (Mp // tm, Np // tn, Kp // tk)

    # --- VMEM budget: double-buffered in/out tiles + f32 accumulator --------
    itemsize = 4  # f32 path
    per_step = itemsize * (
        2 * tm * tk + 2 * tk * tn + 2 * tn + 2 * tm * tn + tm * tn
    )
    vmem_limit = int(min(max(2 * per_step, 32 * 1024 * 1024), 48 * 1024 * 1024))

    cost = pl.CostEstimate(
        flops=2 * Mp * Kp * Np,
        transcendentals=0,
        bytes_accessed=int(
            itemsize * (Mp * Kp + Kp * Np + Np + Mp * Np)
        ),
    )

    out = pl.pallas_call(
        _fused_linear_kernel,
        out_shape=jax.ShapeDtypeStruct((Mp, Np), linput.dtype),
        grid_spec=pltpu.PrefetchScalarGridSpec(
            num_scalar_prefetch=0,
            grid=grid,
            in_specs=[
                pl.BlockSpec((tm, tk), lambda i, j, k: (i, k)),  # fused input
                pl.BlockSpec((tk, tn), lambda i, j, k: (k, j)),  # fused weight
                pl.BlockSpec((1, tn), lambda i, j, k: (0, j)),   # bias (no re-DMA across k)
            ],
            out_specs=pl.BlockSpec((tm, tn), lambda i, j, k: (i, j)),
            scratch_shapes=[pltpu.VMEM((tm, tn), jnp.float32)],
        ),
        compiler_params=pltpu.CompilerParams(
            dimension_semantics=("parallel", "parallel", "arbitrary"),
            vmem_limit_bytes=vmem_limit,
        ),
        cost_estimate=cost,
    )(x, w, b)

    if Mp != M or Np != N:
        out = out[:M, :N]
    return out


def xavier_normal(key, shape):
    # torch.nn.init.xavier_normal_ for a 2-D (in_dim, out_dim) tensor:
    # std = sqrt(2 / (fan_in + fan_out)) with fan_in = shape[1], fan_out = shape[0]
    fan_out, fan_in = shape[0], shape[1]
    std = (2.0 / (fan_in + fan_out)) ** 0.5
    return std * jax.random.normal(key, shape, dtype=jnp.float32)


if __name__ == "__main__":
    in_dim, out_dim, batch = 128, 128, 8

    key = jax.random.PRNGKey(0)
    k_l, k_r, k_lm, k_rm, k_b = jax.random.split(key, 5)

    linput = jax.random.normal(k_l, (batch, in_dim), dtype=jnp.float32)
    rinput = jax.random.normal(k_r, (batch, in_dim), dtype=jnp.float32)
    lmat = xavier_normal(k_lm, (in_dim, out_dim))
    rmat = xavier_normal(k_rm, (in_dim, out_dim))
    bias = xavier_normal(k_b, (1, out_dim))

    out = linear_layer(linput, rinput, lmat, rmat, bias)
    jax.block_until_ready(out)

    # Reference check against plain JAX.
    ref = linput @ lmat + rinput @ rmat + bias
    assert out.shape == (batch, out_dim)
    assert jnp.allclose(out, ref, atol=1e-5, rtol=1e-5)

    # Also exercise a non-tile-multiple / large-ish shape to verify padding +
    # K-tiling + accumulator path (still small enough for a quick run).
    M2, K2, N2 = 200, 384, 320
    ks = jax.random.split(jax.random.PRNGKey(1), 5)
    l2 = jax.random.normal(ks[0], (M2, K2), dtype=jnp.float32)
    r2 = jax.random.normal(ks[1], (M2, K2), dtype=jnp.float32)
    lm2 = xavier_normal(ks[2], (K2, N2))
    rm2 = xavier_normal(ks[3], (K2, N2))
    b2 = xavier_normal(ks[4], (1, N2))
    out2 = linear_layer(l2, r2, lm2, rm2, b2)
    jax.block_until_ready(out2)
    ref2 = l2 @ lm2 + r2 @ rm2 + b2
    assert out2.shape == (M2, N2)
    assert jnp.allclose(out2, ref2, atol=1e-4, rtol=1e-4)

    print("KERNEL_OK")
</pallas_src>

<mosaic_0001>
module attributes {stable_mosaic.version = 11 : i64} {
  func.func @_fused_linear_kernel(%arg0: i32, %arg1: i32, %arg2: i32, %arg3: memref<8x256xf32, #tpu.memory_space<vmem>>, %arg4: memref<256x128xf32, #tpu.memory_space<vmem>>, %arg5: memref<1x128xf32, #tpu.memory_space<vmem>>, %arg6: memref<8x128xf32, #tpu.memory_space<vmem>>, %arg7: memref<8x128xf32, #tpu.memory_space<vmem>>) attributes {dimension_semantics = [#tpu.dimension_semantics<parallel>, #tpu.dimension_semantics<parallel>, #tpu.dimension_semantics<arbitrary>], iteration_bounds = array<i64: 1, 1, 1>, scalar_prefetch = 0 : i64, scratch_operands = 1 : i64, tpu.core_type = #tpu.core_type<tc>, window_params = [{transform_indices = @transform_0, window_bounds = array<i64: 8, 256>}, {transform_indices = @transform_1, window_bounds = array<i64: 256, 128>}, {transform_indices = @transform_2, window_bounds = array<i64: 1, 128>}, {transform_indices = @transform_3, window_bounds = array<i64: 8, 128>}]} {
    %c0_i32 = arith.constant 0 : i32
    %0 = arith.cmpi eq, %arg2, %c0_i32 : i32
    %1 = arith.extui %0 : i1 to i32
    %c0_i32_0 = arith.constant 0 : i32
    %2 = arith.cmpi ne, %1, %c0_i32_0 : i32
    scf.if %2 {
      %cst_10 = arith.constant 0.000000e+00 : f32
      %12 = vector.broadcast %cst_10 : f32 to vector<8x128xf32>
      %c0_11 = arith.constant 0 : index
      %c0_12 = arith.constant 0 : index
      %13 = vector.load %arg7[%c0_11, %c0_12] : memref<8x128xf32, #tpu.memory_space<vmem>>, vector<8x128xf32>
      tpu.vector_store %arg7[%c0_11, %c0_12], %12 {strides = array<i32>} : memref<8x128xf32, #tpu.memory_space<vmem>>, vector<8x128xf32>,
    } else {
    }
    %c0 = arith.constant 0 : index
    %c0_1 = arith.constant 0 : index
    %3 = vector.load %arg7[%c0, %c0_1] : memref<8x128xf32, #tpu.memory_space<vmem>>, vector<8x128xf32>
    %c0_2 = arith.constant 0 : index
    %c0_3 = arith.constant 0 : index
    %4 = vector.load %arg3[%c0_2, %c0_3] : memref<8x256xf32, #tpu.memory_space<vmem>>, vector<8x256xf32>
    %c0_4 = arith.constant 0 : index
    %c0_5 = arith.constant 0 : index
    %5 = vector.load %arg4[%c0_4, %c0_5] : memref<256x128xf32, #tpu.memory_space<vmem>>, vector<256x128xf32>
    %cst = arith.constant dense<0.000000e+00> : vector<8x128xf32>
    %6 = tpu.matmul %4, %5, %cst {dimension_numbers = #tpu.dot_dimension_numbers<[1], [0], [0], [1], [0, 0, 1, 1], [], []>} : vector<8x256xf32>, vector<256x128xf32>, vector<8x128xf32> -> vector<8x128xf32>
    %7 = arith.addf %3, %6 : vector<8x128xf32>
    %c0_6 = arith.constant 0 : index
    %c0_7 = arith.constant 0 : index
    %8 = vector.load %arg7[%c0_6, %c0_7] : memref<8x128xf32, #tpu.memory_space<vmem>>, vector<8x128xf32>
    tpu.vector_store %arg7[%c0_6, %c0_7], %7 {strides = array<i32>} : memref<8x128xf32, #tpu.memory_space<vmem>>, vector<8x128xf32>,
    %c0_i32_8 = arith.constant 0 : i32
    %9 = arith.cmpi eq, %arg2, %c0_i32_8 : i32
    %10 = arith.extui %9 : i1 to i32
    %c0_i32_9 = arith.constant 0 : i32
    %11 = arith.cmpi ne, %10, %c0_i32_9 : i32
    scf.if %11 {
      %c0_10 = arith.constant 0 : index
      %c0_11 = arith.constant 0 : index
      %12 = vector.load %arg7[%c0_10, %c0_11] : memref<8x128xf32, #tpu.memory_space<vmem>>, vector<8x128xf32>
      %c0_12 = arith.constant 0 : index
      %c0_13 = arith.constant 0 : index
      %13 = vector.load %arg5[%c0_12, %c0_13] : memref<1x128xf32, #tpu.memory_space<vmem>>, vector<1x128xf32>
      %14 = vector.broadcast %13 : vector<1x128xf32> to vector<8x128xf32>
      %15 = arith.addf %12, %14 : vector<8x128xf32>
      %c0_14 = arith.constant 0 : index
      %c0_15 = arith.constant 0 : index
      %16 = vector.load %arg6[%c0_14, %c0_15] : memref<8x128xf32, #tpu.memory_space<vmem>>, vector<8x128xf32>
      tpu.vector_store %arg6[%c0_14, %c0_15], %15 {strides = array<i32>} : memref<8x128xf32, #tpu.memory_space<vmem>>, vector<8x128xf32>,
    } else {
    }
    return
  }
  func.func @transform_0(%arg0: i32, %arg1: i32, %arg2: i32) -> (i32, i32) {
    %c0_i32 = arith.constant 0 : i32
    return %arg0, %arg2 : i32, i32
  }
  func.func @transform_1(%arg0: i32, %arg1: i32, %arg2: i32) -> (i32, i32) {
    %c0_i32 = arith.constant 0 : i32
    return %arg2, %arg1 : i32, i32
  }
  func.func @transform_2(%arg0: i32, %arg1: i32, %arg2: i32) -> (i32, i32) {
    %c0_i32 = arith.constant 0 : i32
    %c0_i32_0 = arith.constant 0 : i32
    return %c0_i32, %arg1 : i32, i32
  }
  func.func @transform_3(%arg0: i32, %arg1: i32, %arg2: i32) -> (i32, i32) {
    %c0_i32 = arith.constant 0 : i32
    return %arg0, %arg1 : i32, i32
  }
}

</mosaic_0001>

<llo_original>
// kernel: linear_layer.1
$region0: #{linear_layer.1}
  #allocation0 [shape = 'u32[]', space=smem, size = 0x4, offset = 0x4, fixed_abs, tag = 'smem constant byte address 0x4 - core index']
  #allocation1 [shape = 'u32[72,128]{1,0:T(1,128)}', space=vmem, size = 0x9000, scoped, tag = 'internal scratch']
  #allocation2 [shape = 'f32[8,128]{1,0:T(8,128)}', space=vmem, size = 0x1000, scoped, tag = 'scratch operand']
  %s0 = inlined_call_operand.vmem [shape: f32[8,256], index: 0, kind: input, shape index: {}]
  %s1 = inlined_call_operand.vmem [shape: f32[256,128], index: 1, kind: input, shape index: {}]
  %s2 = inlined_call_operand.vmem [shape: f32[1,128], index: 2, kind: input, shape index: {}]
  %s3 = inlined_call_operand.hbm [shape: f32[8,128], index: 3, kind: output, shape index: {}]
  %s4 = sld [smem:[#allocation0]]
  $region30: #{linear_layer.1} parent=0
    _
  %s6 = ssub.s32 1, %s4
  %s7 = scalar_select 0, %s6, %s4
  $region1: #{linear_layer.1} parent=0
    #allocation3 [shape = 'u8[4096]{0}', space=vmem, size = 0x1000, scoped, tag = 'output window, operand 0, single buffered']
    #allocation4 [shape = 's32[1]{0}', space=sflag, size = 0x4, scoped, tag = 'scoped memory for linear_layer.1']
    %8 = vsyncpa [#allocation4], 0
    // Predicated region
    $region2: #{linear_layer.1} parent=1 // pred_check
      _
    $region3: #{linear_layer.1} parent=1 // pred_check_branch
      %10 = sbr.rel (0) target = $region5
    $region4: #{linear_layer.1} parent=1 // pred_region
      _
    $region5: #{linear_layer.1} parent=1 // pred_fallthru
      _
    // Predicated region
    $region6: #{linear_layer.1} parent=1 // pred_check
      _
    $region7: #{linear_layer.1} parent=1 // pred_check_branch
      %12 = sbr.rel (0) target = $region9
    $region8: #{linear_layer.1} parent=1 // pred_region
      _
    $region9: #{linear_layer.1} parent=1 // pred_fallthru
      _
    // Predicated region
    $region10: #{linear_layer.1} parent=1 // pred_check
      _
    $region11: #{linear_layer.1} parent=1 // pred_check_branch
      %14 = sbr.rel (0) target = $region13
    $region12: #{linear_layer.1} parent=1 // pred_region
      _
    $region13: #{linear_layer.1} parent=1 // pred_fallthru
      _
    %p15 = scmp.eq.s32.totalorder 0, 0
    // Predicated region
    $region14: #{linear_layer.1} parent=1 // pred_check
      %p16 = pneg %p15
    $region15: #{linear_layer.1} parent=1 // pred_check_branch
      %18 = sbr.rel (%p16) target = $region17
    $region16: #{linear_layer.1} parent=1 // pred_region
      %19 = vst [vmem:[#allocation2] sm:$0xff] 0.0
    $region17: #{linear_layer.1} parent=1 // pred_fallthru
      _
    %v20 = vld [vmem:[#allocation2] sm:$0xff]
    %v21 = vld [vmem:[%s0] sm:$0xff]
    %v22 = vld [vmem:[%s0 + $0x8] sm:$0xff]
    %v23 = vld [vmem:[%s1] sm:$0xff]
    %v24 = vld [vmem:[%s1 + $0x8] sm:$0xff]
    %v25 = vld [vmem:[%s1 + $0x10] sm:$0xff]
    %v26 = vld [vmem:[%s1 + $0x18] sm:$0xff]
    %v27 = vld [vmem:[%s1 + $0x20] sm:$0xff]
    %v28 = vld [vmem:[%s1 + $0x28] sm:$0xff]
    %v29 = vld [vmem:[%s1 + $0x30] sm:$0xff]
    %v30 = vld [vmem:[%s1 + $0x38] sm:$0xff]
    %v31 = vld [vmem:[%s1 + $0x40] sm:$0xff]
    %v32 = vld [vmem:[%s1 + $0x48] sm:$0xff]
    %v33 = vld [vmem:[%s1 + $0x50] sm:$0xff]
    %v34 = vld [vmem:[%s1 + $0x58] sm:$0xff]
    %v35 = vld [vmem:[%s1 + $0x60] sm:$0xff]
    %v36 = vld [vmem:[%s1 + $0x68] sm:$0xff]
    %v37 = vld [vmem:[%s1 + $0x70] sm:$0xff]
    %v38 = vld [vmem:[%s1 + $0x78] sm:$0xff]
    %v39 = vld [vmem:[%s1 + $0x80] sm:$0xff]
    %v40 = vld [vmem:[%s1 + $0x88] sm:$0xff]
    %v41 = vld [vmem:[%s1 + $0x90] sm:$0xff]
    %v42 = vld [vmem:[%s1 + $0x98] sm:$0xff]
    %v43 = vld [vmem:[%s1 + $0xa0] sm:$0xff]
    %v44 = vld [vmem:[%s1 + $0xa8] sm:$0xff]
    %v45 = vld [vmem:[%s1 + $0xb0] sm:$0xff]
    %v46 = vld [vmem:[%s1 + $0xb8] sm:$0xff]
    %v47 = vld [vmem:[%s1 + $0xc0] sm:$0xff]
    %v48 = vld [vmem:[%s1 + $0xc8] sm:$0xff]
    %v49 = vld [vmem:[%s1 + $0xd0] sm:$0xff]
    %v50 = vld [vmem:[%s1 + $0xd8] sm:$0xff]
    %v51 = vld [vmem:[%s1 + $0xe0] sm:$0xff]
    %v52 = vld [vmem:[%s1 + $0xe8] sm:$0xff]
    %v53 = vld [vmem:[%s1 + $0xf0] sm:$0xff]
    %v54 = vld [vmem:[%s1 + $0xf8] sm:$0xff]
    %55 = vmatpush.msra.mxu0 %v38
    %56 = vmatpush.msra.mxu0 %v37
    %57 = vmatpush.msra.mxu0 %v36
    %58 = vmatpush.msra.mxu0 %v35
    %59 = vmatpush.msra.mxu0 %v34
    %60 = vmatpush.msra.mxu0 %v33
    %61 = vmatpush.msra.mxu0 %v32
    %62 = vmatpush.msra.mxu0 %v31
    %63 = vmatpush.msra.mxu0 %v30
    %64 = vmatpush.msra.mxu0 %v29
    %65 = vmatpush.msra.mxu0 %v28
    %66 = vmatpush.msra.mxu0 %v27
    %67 = vmatpush.msra.mxu0 %v26
    %68 = vmatpush.msra.mxu0 %v25
    %69 = vmatpush.msra.mxu0 %v24
    %70 = vmatpush.msra.mxu0 %v23
    %71 = vmatmul.f32.gmra.mxu0 %v21
    %v72 = vpop.f32.mrf.mxu0
    %v73 = vadd.f32 0.0, %v72
    %74 = vdwg.mxu0
    %75 = vmatpush.msra.mxu0 %v54
    %76 = vmatpush.msra.mxu0 %v53
    %77 = vmatpush.msra.mxu0 %v52
    %78 = vmatpush.msra.mxu0 %v51
    %79 = vmatpush.msra.mxu0 %v50
    %80 = vmatpush.msra.mxu0 %v49
    %81 = vmatpush.msra.mxu0 %v48
    %82 = vmatpush.msra.mxu0 %v47
    %83 = vmatpush.msra.mxu0 %v46
    %84 = vmatpush.msra.mxu0 %v45
    %85 = vmatpush.msra.mxu0 %v44
    %86 = vmatpush.msra.mxu0 %v43
    %87 = vmatpush.msra.mxu0 %v42
    %88 = vmatpush.msra.mxu0 %v41
    %89 = vmatpush.msra.mxu0 %v40
    %90 = vmatpush.msra.mxu0 %v39
    %91 = vmatmul.f32.gmra.mxu0 %v22
    %v92 = vpop.f32.mrf.mxu0
    %v93 = vadd.f32 %v73, %v92
    %94 = vdwg.mxu0
    %v95 = vadd.f32 %v20, %v93
    %96 = vst [vmem:[#allocation2] sm:$0xff] %v95
    // Predicated region
    $region18: #{linear_layer.1} parent=1 // pred_check
      %p97 = pneg %p15
    $region19: #{linear_layer.1} parent=1 // pred_check_branch
      %99 = sbr.rel (%p97) target = $region21
    $region20: #{linear_layer.1} parent=1 // pred_region
      %v100 = vld [vmem:[#allocation2] sm:$0xff]
      %v101 = vld [vmem:[%s2] sm:$0x1]
      %v103 = vperm.slane %v101, 0
      %v105 = vadd.f32 %v100, %v103
      %106 = vst [vmem:[#allocation3] sm:$0xff] %v105
    $region21: #{linear_layer.1} parent=1 // pred_fallthru
      _
    // Predicated region
    $region22: #{linear_layer.1} parent=1 // pred_check
      _
    $region23: #{linear_layer.1} parent=1 // pred_check_branch
      %108 = sbr.rel (0) target = $region25
    $region24: #{linear_layer.1} parent=1 // pred_region
      %110 = vsyncadd [#allocation4], 0
      %s112 = sshll.u32 [#allocation3], 4
      %s113 = int_to_ptr.vmem [resolvable:$true] %s112
      %s114 = sshll.u32 %s3, 4
      %s115 = int_to_ptr.hbm [resolvable:$true] %s114
      %117 = dma.vmem_to_hbm [thread:$0]  %s113, 128, %s115, [#allocation4]
    $region25: #{linear_layer.1} parent=1 // pred_fallthru
      _
    // Predicated region
    $region26: #{linear_layer.1} parent=1 // pred_check
      _
    $region27: #{linear_layer.1} parent=1 // pred_check_branch
      %119 = sbr.rel (0) target = $region29
    $region28: #{linear_layer.1} parent=1 // pred_region
      %121 = dma.done [#allocation4], 128
    $region29: #{linear_layer.1} parent=1 // pred_fallthru
      _
    %122 = vsyncpa [#allocation4], 1

</llo_original>
